<compile_context>
chip_gen: v7x
topology: tpu7x:2x2x1
jax: 0.10.0
libtpu: 0.0.40
codegen_flags: <defaults>
</compile_context>

<pallas_src>
import functools

import jax
import jax.numpy as jnp
from jax.experimental import pallas as pl
from jax.experimental.pallas import tpu as pltpu


def _round_up(x, m):
    return ((x + m - 1) // m) * m


def mlp2_kernel(z_ref, h_ref, w1_ref, w2_ref, b_ref, o_ref):
    # Linear over the (virtually) concatenated input, done as two MXU dots.
    y = jnp.dot(z_ref[...], w1_ref[...], preferred_element_type=jnp.float32)
    y = y + jnp.dot(h_ref[...], w2_ref[...], preferred_element_type=jnp.float32)
    y = y + b_ref[...]                                  # (TB, OUT_PAD) + (1, OUT_PAD)

    # LeakyReLU (torch default negative_slope = 0.01).
    y = jnp.where(y >= 0, y, 0.01 * y)

    # Numerically-stable softmax along the feature axis. Padded columns carry a
    # -1e30 bias, so they contribute exp(...) == 0 and do not perturb the sum.
    m = jnp.max(y, axis=1, keepdims=True)
    e = jnp.exp(y - m)
    denom = jnp.sum(e, axis=1, keepdims=True)
    # Exact divide: keeps each row summing to 1 up to float32 rounding
    # (approx reciprocal previously broke the normalization guarantee).
    o_ref[...] = (e / denom).astype(o_ref.dtype)


@functools.partial(jax.jit, static_argnames=("block_b",))
def mlp2_forward(zi, hi, weight, bias, *, block_b=512):
    """zi: (B, D1), hi: (B, D2), weight: (D1+D2, OUT), bias: (OUT,)."""
    B, D1 = zi.shape
    D2 = hi.shape[1]
    OUT = weight.shape[1]

    # --- Lane-dense output: pad OUT up to a multiple of 128. -------------------
    OUT_PAD = max(128, _round_up(OUT, 128))
    if OUT_PAD != OUT:
        weight = jnp.pad(weight, ((0, 0), (0, OUT_PAD - OUT)))
        # Huge negative bias on padded columns -> softmax weight ~0 there.
        bias = jnp.pad(bias, (0, OUT_PAD - OUT), constant_values=-1e30)

    # Split weight so the kernel never has to concatenate along the lane axis.
    w1 = weight[:D1, :]          # (D1, OUT_PAD)
    w2 = weight[D1:, :]          # (D2, OUT_PAD)
    bias2d = bias.reshape(1, OUT_PAD)

    # --- Batch tiling: multiple of 8 sublanes, capped for VMEM (v7x: 64 MiB). --
    TB = min(block_b, _round_up(B, 8))
    B_pad = _round_up(B, TB)
    if B_pad != B:
        zi = jnp.pad(zi, ((0, B_pad - B), (0, 0)))
        hi = jnp.pad(hi, ((0, B_pad - B), (0, 0)))

    grid = (pl.cdiv(B_pad, TB),)
    vmem = pltpu.MemorySpace.VMEM

    out = pl.pallas_call(
        mlp2_kernel,
        out_shape=jax.ShapeDtypeStruct((B_pad, OUT_PAD), zi.dtype),
        grid_spec=pltpu.PrefetchScalarGridSpec(
            num_scalar_prefetch=0,
            grid=grid,
            in_specs=[
                # Batch-tiled activations (double-buffered across the grid).
                pl.BlockSpec((TB, D1), lambda i: (i, 0), memory_space=vmem),
                pl.BlockSpec((TB, D2), lambda i: (i, 0), memory_space=vmem),
                # Weights / bias stay resident in VMEM across all grid steps.
                pl.BlockSpec((D1, OUT_PAD), lambda i: (0, 0), memory_space=vmem),
                pl.BlockSpec((D2, OUT_PAD), lambda i: (0, 0), memory_space=vmem),
                pl.BlockSpec((1, OUT_PAD), lambda i: (0, 0), memory_space=vmem),
            ],
            out_specs=pl.BlockSpec((TB, OUT_PAD), lambda i: (i, 0),
                                   memory_space=vmem),
        ),
        compiler_params=pltpu.CompilerParams(
            dimension_semantics=("parallel",),   # shard batch tiles across TCs (v7x)
        ),
        cost_estimate=pl.CostEstimate(
            flops=2 * B_pad * (D1 + D2) * OUT_PAD,
            transcendentals=B_pad * OUT_PAD,
            bytes_accessed=4 * (B_pad * (D1 + D2)
                                + (D1 + D2) * OUT_PAD
                                + OUT_PAD
                                + B_pad * OUT_PAD),
        ),
    )(zi, hi, w1, w2, bias2d)

    # Slice back to the logical shape (drops batch padding and padded lanes).
    return out[:B, :OUT]


def reference_forward(zi, hi, weight, bias):
    x = jnp.concatenate([zi, hi], axis=1)
    y = x @ weight + bias
    y = jnp.where(y >= 0, y, 0.01 * y)
    return jax.nn.softmax(y, axis=1)


if __name__ == "__main__":
    # Small shapes consistent with the module: Zi (B, D1), Hi (B, D2),
    # input_dim = D1 + D2, output_dim = OUT.
    B, D1, D2, OUT = 8, 16, 16, 32
    INPUT_DIM = D1 + D2

    key = jax.random.PRNGKey(0)
    kz, kh, kw, kb = jax.random.split(key, 4)

    zi = jax.random.normal(kz, (B, D1), dtype=jnp.float32)
    hi = jax.random.normal(kh, (B, D2), dtype=jnp.float32)

    # Deterministic init mimicking nn.Linear's uniform(-1/sqrt(in), 1/sqrt(in)).
    bound = 1.0 / (INPUT_DIM ** 0.5)
    weight = jax.random.uniform(kw, (INPUT_DIM, OUT), jnp.float32, -bound, bound)
    bias = jax.random.uniform(kb, (OUT,), jnp.float32, -bound, bound)

    out = mlp2_forward(zi, hi, weight, bias)
    out = jax.block_until_ready(out)

    ref = reference_forward(zi, hi, weight, bias)
    assert out.shape == (B, OUT)
    assert jnp.allclose(out, ref, atol=1e-5, rtol=1e-5), "mismatch vs reference"
    assert jnp.allclose(jnp.sum(out, axis=1), 1.0, atol=1e-5), "rows not normalized"

    print("KERNEL_OK")
</pallas_src>

<mosaic_0001>
module attributes {stable_mosaic.version = 11 : i64} {
  func.func @mlp2_kernel(%arg0: i32, %arg1: memref<8x16xf32, #tpu.memory_space<vmem>>, %arg2: memref<8x16xf32, #tpu.memory_space<vmem>>, %arg3: memref<16x128xf32, #tpu.memory_space<vmem>>, %arg4: memref<16x128xf32, #tpu.memory_space<vmem>>, %arg5: memref<1x128xf32, #tpu.memory_space<vmem>>, %arg6: memref<8x128xf32, #tpu.memory_space<vmem>>) attributes {dimension_semantics = [#tpu.dimension_semantics<parallel>], iteration_bounds = array<i64: 1>, scalar_prefetch = 0 : i64, scratch_operands = 0 : i64, tpu.core_type = #tpu.core_type<tc>, window_params = [{transform_indices = @transform_0, window_bounds = array<i64: 8, 16>}, {transform_indices = @transform_1, window_bounds = array<i64: 8, 16>}, {pipeline_mode = #tpu.pipeline_mode<synchronous>, transform_indices = @transform_2, window_bounds = array<i64: 16, 128>}, {pipeline_mode = #tpu.pipeline_mode<synchronous>, transform_indices = @transform_3, window_bounds = array<i64: 16, 128>}, {pipeline_mode = #tpu.pipeline_mode<synchronous>, transform_indices = @transform_4, window_bounds = array<i64: 1, 128>}, {transform_indices = @transform_5, window_bounds = array<i64: 8, 128>}]} {
    %c0 = arith.constant 0 : index
    %c0_0 = arith.constant 0 : index
    %0 = vector.load %arg1[%c0, %c0_0] : memref<8x16xf32, #tpu.memory_space<vmem>>, vector<8x16xf32>
    %c0_1 = arith.constant 0 : index
    %c0_2 = arith.constant 0 : index
    %1 = vector.load %arg3[%c0_1, %c0_2] : memref<16x128xf32, #tpu.memory_space<vmem>>, vector<16x128xf32>
    %cst = arith.constant dense<0.000000e+00> : vector<8x128xf32>
    %2 = tpu.matmul %0, %1, %cst {dimension_numbers = #tpu.dot_dimension_numbers<[1], [0], [0], [1], [0, 0, 1, 1], [], []>} : vector<8x16xf32>, vector<16x128xf32>, vector<8x128xf32> -> vector<8x128xf32>
    %c0_3 = arith.constant 0 : index
    %c0_4 = arith.constant 0 : index
    %3 = vector.load %arg2[%c0_3, %c0_4] : memref<8x16xf32, #tpu.memory_space<vmem>>, vector<8x16xf32>
    %c0_5 = arith.constant 0 : index
    %c0_6 = arith.constant 0 : index
    %4 = vector.load %arg4[%c0_5, %c0_6] : memref<16x128xf32, #tpu.memory_space<vmem>>, vector<16x128xf32>
    %cst_7 = arith.constant dense<0.000000e+00> : vector<8x128xf32>
    %5 = tpu.matmul %3, %4, %cst_7 {dimension_numbers = #tpu.dot_dimension_numbers<[1], [0], [0], [1], [0, 0, 1, 1], [], []>} : vector<8x16xf32>, vector<16x128xf32>, vector<8x128xf32> -> vector<8x128xf32>
    %6 = arith.addf %2, %5 : vector<8x128xf32>
    %c0_8 = arith.constant 0 : index
    %c0_9 = arith.constant 0 : index
    %7 = vector.load %arg5[%c0_8, %c0_9] : memref<1x128xf32, #tpu.memory_space<vmem>>, vector<1x128xf32>
    %8 = vector.broadcast %7 : vector<1x128xf32> to vector<8x128xf32>
    %9 = arith.addf %6, %8 : vector<8x128xf32>
    %cst_10 = arith.constant 0.000000e+00 : f32
    %10 = vector.broadcast %cst_10 : f32 to vector<8x128xf32>
    %11 = arith.cmpf oge, %9, %10 : vector<8x128xf32>
    %cst_11 = arith.constant 0.00999999977 : f32
    %12 = vector.broadcast %cst_11 : f32 to vector<8x128xf32>
    %13 = arith.mulf %12, %9 : vector<8x128xf32>
    %14 = arith.select %11, %9, %13 : vector<8x128xi1>, vector<8x128xf32>
    %cst_12 = arith.constant dense<0xFF800000> : vector<8xf32>
    %15 = vector.multi_reduction <maximumf>, %14, %cst_12 [1] : vector<8x128xf32> to vector<8xf32>
    %16 = vector.shape_cast %15 : vector<8xf32> to vector<8x1xf32>
    %17 = vector.broadcast %16 : vector<8x1xf32> to vector<8x128xf32>
    %18 = arith.subf %14, %17 : vector<8x128xf32>
    %19 = math.exp %18 : vector<8x128xf32>
    %cst_13 = arith.constant dense<0.000000e+00> : vector<8xf32>
    %20 = vector.multi_reduction <add>, %19, %cst_13 [1] : vector<8x128xf32> to vector<8xf32>
    %21 = vector.shape_cast %20 : vector<8xf32> to vector<8x1xf32>
    %22 = vector.broadcast %21 : vector<8x1xf32> to vector<8x128xf32>
    %23 = arith.divf %19, %22 : vector<8x128xf32>
    %c0_14 = arith.constant 0 : index
    %c0_15 = arith.constant 0 : index
    %24 = vector.load %arg6[%c0_14, %c0_15] : memref<8x128xf32, #tpu.memory_space<vmem>>, vector<8x128xf32>
    tpu.vector_store %arg6[%c0_14, %c0_15], %23 {strides = array<i32>} : memref<8x128xf32, #tpu.memory_space<vmem>>, vector<8x128xf32>,
    return
  }
  func.func @transform_0(%arg0: i32) -> (i32, i32) {
    %c0_i32 = arith.constant 0 : i32
    %c0_i32_0 = arith.constant 0 : i32
    return %arg0, %c0_i32 : i32, i32
  }
  func.func @transform_1(%arg0: i32) -> (i32, i32) {
    %c0_i32 = arith.constant 0 : i32
    %c0_i32_0 = arith.constant 0 : i32
    return %arg0, %c0_i32 : i32, i32
  }
  func.func @transform_2(%arg0: i32) -> (i32, i32) {
    %c0_i32 = arith.constant 0 : i32
    %c0_i32_0 = arith.constant 0 : i32
    %c0_i32_1 = arith.constant 0 : i32
    return %c0_i32, %c0_i32_0 : i32, i32
  }
  func.func @transform_3(%arg0: i32) -> (i32, i32) {
    %c0_i32 = arith.constant 0 : i32
    %c0_i32_0 = arith.constant 0 : i32
    %c0_i32_1 = arith.constant 0 : i32
    return %c0_i32, %c0_i32_0 : i32, i32
  }
  func.func @transform_4(%arg0: i32) -> (i32, i32) {
    %c0_i32 = arith.constant 0 : i32
    %c0_i32_0 = arith.constant 0 : i32
    %c0_i32_1 = arith.constant 0 : i32
    return %c0_i32, %c0_i32_0 : i32, i32
  }
  func.func @transform_5(%arg0: i32) -> (i32, i32) {
    %c0_i32 = arith.constant 0 : i32
    %c0_i32_0 = arith.constant 0 : i32
    return %arg0, %c0_i32 : i32, i32
  }
}

</mosaic_0001>

<llo_original>
// kernel: mlp2_forward.1
$region0: #{mlp2_forward.1}
  #allocation0 [shape = 'u32[]', space=smem, size = 0x4, offset = 0x4, fixed_abs, tag = 'smem constant byte address 0x4 - core index']
  #allocation1 [shape = 'u32[144,128]{1,0:T(1,128)}', space=vmem, size = 0x12000, scoped, tag = 'internal scratch']
  %s0 = inlined_call_operand.vmem [shape: f32[8,16], index: 0, kind: input, shape index: {}]
  %s1 = inlined_call_operand.vmem [shape: f32[8,16], index: 1, kind: input, shape index: {}]
  %s2 = inlined_call_operand.vmem [shape: f32[16,128], index: 2, kind: input, shape index: {}]
  %s3 = inlined_call_operand.vmem [shape: f32[16,128], index: 3, kind: input, shape index: {}]
  %s4 = inlined_call_operand.vmem [shape: f32[1,128], index: 4, kind: input, shape index: {}]
  %s5 = inlined_call_operand.hbm [shape: f32[8,128], index: 5, kind: output, shape index: {}]
  %s6 = sld [smem:[#allocation0]]
  $region30: #{mlp2_forward.1} parent=0
    _
  %s8 = ssub.s32 1, %s6
  %s9 = scalar_select 0, %s8, %s6
  $region1: #{mlp2_forward.1} parent=0
    #allocation2 [shape = 'u8[4096]{0}', space=vmem, size = 0x1000, scoped, tag = 'output window, operand 0, single buffered']
    #allocation3 [shape = 's32[1]{0}', space=sflag, size = 0x4, scoped, tag = 'scoped memory for mlp2_forward.1']
    %10 = vsyncpa [#allocation3], 0
    // Predicated region
    $region2: #{mlp2_forward.1} parent=1 // pred_check
      _
    $region3: #{mlp2_forward.1} parent=1 // pred_check_branch
      %12 = sbr.rel (0) target = $region5
    $region4: #{mlp2_forward.1} parent=1 // pred_region
      _
    $region5: #{mlp2_forward.1} parent=1 // pred_fallthru
      _
    // Predicated region
    $region6: #{mlp2_forward.1} parent=1 // pred_check
      _
    $region7: #{mlp2_forward.1} parent=1 // pred_check_branch
      %14 = sbr.rel (0) target = $region9
    $region8: #{mlp2_forward.1} parent=1 // pred_region
      _
    $region9: #{mlp2_forward.1} parent=1 // pred_fallthru
      _
    // Predicated region
    $region10: #{mlp2_forward.1} parent=1 // pred_check
      _
    $region11: #{mlp2_forward.1} parent=1 // pred_check_branch
      %16 = sbr.rel (0) target = $region13
    $region12: #{mlp2_forward.1} parent=1 // pred_region
      _
    $region13: #{mlp2_forward.1} parent=1 // pred_fallthru
      _
    // Predicated region
    $region14: #{mlp2_forward.1} parent=1 // pred_check
      _
    $region15: #{mlp2_forward.1} parent=1 // pred_check_branch
      %18 = sbr.rel (0) target = $region17
    $region16: #{mlp2_forward.1} parent=1 // pred_region
      _
    $region17: #{mlp2_forward.1} parent=1 // pred_fallthru
      _
    // Predicated region
    $region18: #{mlp2_forward.1} parent=1 // pred_check
      _
    $region19: #{mlp2_forward.1} parent=1 // pred_check_branch
      %20 = sbr.rel (0) target = $region21
    $region20: #{mlp2_forward.1} parent=1 // pred_region
      _
    $region21: #{mlp2_forward.1} parent=1 // pred_fallthru
      _
    %v21 = vld [vmem:[%s0] sm:$0xff]
    %v22 = vld [vmem:[%s2] sm:$0xff]
    %v23 = vld [vmem:[%s2 + $0x8] sm:$0xff]
    %v24 = vld [vmem:[%s1] sm:$0xff]
    %v25 = vld [vmem:[%s3] sm:$0xff]
    %v26 = vld [vmem:[%s3 + $0x8] sm:$0xff]
    %vm27 = vcmask 130048
    %v29 = vsel %vm27, %v24, 0
    %31 = vmatprep.subr.mxu0 0.0
    %32 = vmatpush1.msra.mxu0 %v25
    %33 = vmatprep.subr.mxu0 0.0
    %34 = vmatpush1.msra.mxu0 %v26
    %35 = vmatprep.subr.mxu0 0.0
    %36 = vmatpush1.msra.mxu0 0.0
    %37 = vmatprep.subr.mxu0 0.0
    %38 = vmatpush1.msra.mxu0 0.0
    %39 = vmatprep.subr.mxu0 0.0
    %40 = vmatpush1.msra.mxu0 0.0
    %41 = vmatprep.subr.mxu0 0.0
    %42 = vmatpush1.msra.mxu0 0.0
    %43 = vmatprep.subr.mxu0 0.0
    %44 = vmatpush1.msra.mxu0 0.0
    %45 = vmatprep.subr.mxu0 0.0
    %46 = vmatpush1.msra.mxu0 0.0
    %47 = vmatprep.subr.mxu0 0.0
    %48 = vmatpush1.msra.mxu0 0.0
    %49 = vmatprep.subr.mxu0 0.0
    %50 = vmatpush1.msra.mxu0 0.0
    %51 = vmatprep.subr.mxu0 0.0
    %52 = vmatpush1.msra.mxu0 0.0
    %53 = vmatprep.subr.mxu0 0.0
    %54 = vmatpush1.msra.mxu0 0.0
    %55 = vmatprep.subr.mxu0 0.0
    %56 = vmatpush1.msra.mxu0 0.0
    %57 = vmatprep.subr.mxu0 0.0
    %58 = vmatpush1.msra.mxu0 0.0
    %59 = vmatprep.subr.mxu0 0.0
    %60 = vmatpush1.msra.mxu0 0.0
    %61 = vmatprep.subr.mxu0 0.0
    %62 = vmatpush1.msra.mxu0 0.0
    %63 = vmatprep.subr.mxu0 0.0
    %64 = vmatpush1.msra.mxu0 0.0
    %65 = vmatprep.subr.mxu0 0.0
    %66 = vmatpush1.msra.mxu0 0.0
    %67 = vmatprep.subr.mxu0 0.0
    %68 = vmatpush1.msra.mxu0 0.0
    %69 = vmatprep.subr.mxu0 0.0
    %70 = vmatpush1.msra.mxu0 0.0
    %71 = vmatprep.subr.mxu0 0.0
    %72 = vmatpush1.msra.mxu0 0.0
    %73 = vmatprep.subr.mxu0 0.0
    %74 = vmatpush1.msra.mxu0 0.0
    %75 = vmatprep.subr.mxu0 0.0
    %76 = vmatpush1.msra.mxu0 0.0
    %77 = vmatprep.subr.mxu0 0.0
    %78 = vmatpush1.msra.mxu0 0.0
    %79 = vmatprep.subr.mxu0 0.0
    %80 = vmatpush1.msra.mxu0 0.0
    %81 = vmatprep.subr.mxu0 0.0
    %82 = vmatpush1.msra.mxu0 0.0
    %83 = vmatprep.subr.mxu0 0.0
    %84 = vmatpush1.msra.mxu0 0.0
    %85 = vmatprep.subr.mxu0 0.0
    %86 = vmatpush1.msra.mxu0 0.0
    %87 = vmatprep.subr.mxu0 0.0
    %88 = vmatpush1.msra.mxu0 0.0
    %89 = vmatprep.subr.mxu0 0.0
    %90 = vmatpush1.msra.mxu0 0.0
    %91 = vmatprep.subr.mxu0 0.0
    %92 = vmatpush1.msra.mxu0 0.0
    %93 = vmatprep.subr.mxu0 0.0
    %94 = vmatpush1.msra.mxu0 0.0
    %95 = vmatprep.mubr.f32.mxu0 0.0
    %96 = vmatmul.mubr.f32.gmra.mrb[0].mxu0 %v29
    %v97 = vpop.f32.mrb[0].mxu0
    %v98 = vadd.f32 0.0, %v97
    %v99 = vpop.f32.mrb[0].mxu0
    %100 = vdwg.mxu0
    %v102 = vsel %vm27, %v21, 0
    %104 = vmatprep.subr.mxu0 0.0
    %105 = vmatpush1.msra.mxu0 %v22
    %106 = vmatprep.subr.mxu0 0.0
    %107 = vmatpush1.msra.mxu0 %v23
    %108 = vmatprep.subr.mxu0 0.0
    %109 = vmatpush1.msra.mxu0 0.0
    %110 = vmatprep.subr.mxu0 0.0
    %111 = vmatpush1.msra.mxu0 0.0
    %112 = vmatprep.subr.mxu0 0.0
    %113 = vmatpush1.msra.mxu0 0.0
    %114 = vmatprep.subr.mxu0 0.0
    %115 = vmatpush1.msra.mxu0 0.0
    %116 = vmatprep.subr.mxu0 0.0
    %117 = vmatpush1.msra.mxu0 0.0
    %118 = vmatprep.subr.mxu0 0.0
    %119 = vmatpush1.msra.mxu0 0.0
    %120 = vmatprep.subr.mxu0 0.0
    %121 = vmatpush1.msra.mxu0 0.0
    %122 = vmatprep.subr.mxu0 0.0
    %123 = vmatpush1.msra.mxu0 0.0
    %124 = vmatprep.subr.mxu0 0.0
    %125 = vmatpush1.msra.mxu0 0.0
    %126 = vmatprep.subr.mxu0 0.0
    %127 = vmatpush1.msra.mxu0 0.0
    %128 = vmatprep.subr.mxu0 0.0
    %129 = vmatpush1.msra.mxu0 0.0
    %130 = vmatprep.subr.mxu0 0.0
    %131 = vmatpush1.msra.mxu0 0.0
    %132 = vmatprep.subr.mxu0 0.0
    %133 = vmatpush1.msra.mxu0 0.0
    %134 = vmatprep.subr.mxu0 0.0
    %135 = vmatpush1.msra.mxu0 0.0
    %136 = vmatprep.subr.mxu0 0.0
    %137 = vmatpush1.msra.mxu0 0.0
    %138 = vmatprep.subr.mxu0 0.0
    %139 = vmatpush1.msra.mxu0 0.0
    %140 = vmatprep.subr.mxu0 0.0
    %141 = vmatpush1.msra.mxu0 0.0
    %142 = vmatprep.subr.mxu0 0.0
    %143 = vmatpush1.msra.mxu0 0.0
    %144 = vmatprep.subr.mxu0 0.0
    %145 = vmatpush1.msra.mxu0 0.0
    %146 = vmatprep.subr.mxu0 0.0
    %147 = vmatpush1.msra.mxu0 0.0
    %148 = vmatprep.subr.mxu0 0.0
    %149 = vmatpush1.msra.mxu0 0.0
    %150 = vmatprep.subr.mxu0 0.0
    %151 = vmatpush1.msra.mxu0 0.0
    %152 = vmatprep.subr.mxu0 0.0
    %153 = vmatpush1.msra.mxu0 0.0
    %154 = vmatprep.subr.mxu0 0.0
    %155 = vmatpush1.msra.mxu0 0.0
    %156 = vmatprep.subr.mxu0 0.0
    %157 = vmatpush1.msra.mxu0 0.0
    %158 = vmatprep.subr.mxu0 0.0
    %159 = vmatpush1.msra.mxu0 0.0
    %160 = vmatprep.subr.mxu0 0.0
    %161 = vmatpush1.msra.mxu0 0.0
    %162 = vmatprep.subr.mxu0 0.0
    %163 = vmatpush1.msra.mxu0 0.0
    %164 = vmatprep.subr.mxu0 0.0
    %165 = vmatpush1.msra.mxu0 0.0
    %166 = vmatprep.subr.mxu0 0.0
    %167 = vmatpush1.msra.mxu0 0.0
    %168 = vmatprep.mubr.f32.mxu0 0.0
    %169 = vmatmul.mubr.f32.gmra.mrb[0].mxu0 %v102
    %v170 = vpop.f32.mrb[0].mxu0
    %v171 = vadd.f32 %v98, %v170
    %v172 = vpop.f32.mrb[0].mxu0
    %173 = vdwg.mxu0
    %v174 = vld [vmem:[%s4] sm:$0x1]
    %v176 = vlaneseq
    %v177 = vshrl.u32 %v176, 7
    %v178 = vsub.s32 0, %v177
    %v179 = vrot.slane %v174, %v178
    %v181 = vadd.f32 %v171, %v179
    %vm182 = vcmp.ge.f32.partialorder %v181, 0.0
    %v183 = vmul.f32 %v181, 0.01
    %v184 = vsel %vm182, %v181, %v183
    %185 = vmax.xlane.f32.xlu0 %v184
    %v186 = vpop.xlane.xlu0 %185
    %v187 = vsub.f32 %v184, %v186
    %v188 = vmul.f32 %v187, 1.442695
    %v189 = vpow.pop %v188
    %190 = vadd.xlane.f32.xlu0 %v189
    %v191 = vpop.xlane.xlu0 %190
    %v192 = vrcp.pop %v191
    %v193 = vmul.f32 %v189, %v192
    %194 = vst [vmem:[#allocation2] sm:$0xff] %v193
    // Predicated region
    $region22: #{mlp2_forward.1} parent=1 // pred_check
      _
    $region23: #{mlp2_forward.1} parent=1 // pred_check_branch
      %196 = sbr.rel (0) target = $region25
    $region24: #{mlp2_forward.1} parent=1 // pred_region
      %s198 = ssub.s32 128, 128
      %199 = vsyncadd [#allocation3], %s198
      %s201 = sshll.u32 [#allocation2], 4
      %s202 = int_to_ptr.vmem [resolvable:$true] %s201
      %204 = dma.vmem_to_hbm [thread:$0]  %s202, 128, %s5, [#allocation3]
    $region25: #{mlp2_forward.1} parent=1 // pred_fallthru
      _
    // Predicated region
    $region26: #{mlp2_forward.1} parent=1 // pred_check
      _
    $region27: #{mlp2_forward.1} parent=1 // pred_check_branch
      %206 = sbr.rel (0) target = $region29
    $region28: #{mlp2_forward.1} parent=1 // pred_region
      %207 = dma.done [#allocation3], 128
    $region29: #{mlp2_forward.1} parent=1 // pred_fallthru
      _
    %208 = vsyncpa [#allocation3], 1

</llo_original>
